<compile_context>
chip_gen: v5e
topology: v5e:2x2
jax: 0.10.0
libtpu: 0.0.40
codegen_flags: <defaults>
</compile_context>

<pallas_src>
import jax
import jax.numpy as jnp
from jax.experimental import pallas as pl
from jax.experimental.pallas import tpu as pltpu

_LANE = 128
_SUBLANE = 8
_GRANULE = _LANE * _SUBLANE  # 1024 pixels: keeps (r, 128) blocks (8,128)-aligned
_MAX_TILE_GRANULES = 384     # 393216 px ~= 22 MiB double-buffered f32 (v7x-safe)


def _vignette_kernel(x_ref, o_ref):
    # x_ref: (6, R, 128) stacked component-major tile
    #        rows 0..2 = ray xyz, rows 3..5 = frame_z xyz
    # o_ref: (R, 128) lane-dense output tile
    rx = x_ref[0].astype(jnp.float32)
    ry = x_ref[1].astype(jnp.float32)
    rz = x_ref[2].astype(jnp.float32)
    fx = x_ref[3].astype(jnp.float32)
    fy = x_ref[4].astype(jnp.float32)
    fz = x_ref[5].astype(jnp.float32)
    d = rx * fx + ry * fy + rz * fz          # <ray, frame_z> per pixel
    o_ref[...] = (d * d * d).astype(o_ref.dtype)


def vignette_shader(ray_directions, pixel_frames, *, tile_pixels=262144):
    """ray_directions: (..., 3)
       pixel_frames:   (..., 3, 3)   (frame_z = pixel_frames[..., 2])
       returns         (..., 1)  ==  (<ray, frame_z>)**3  (dtype = promoted input dtype)"""
    *batch_shape, three = ray_directions.shape
    assert three == 3
    assert pixel_frames.shape[-2:] == (3, 3)
    assert tuple(pixel_frames.shape[:-2]) == tuple(batch_shape)

    out_dtype = jnp.result_type(ray_directions.dtype, pixel_frames.dtype)

    p = 1
    for d in batch_shape:
        p *= int(d)

    # ---- tiling: (8,128)-granular, overhead-amortizing, >=2 tiles when possible ----
    p_granules = -(-p // _GRANULE)                                  # cdiv
    tile_granules = max(1, int(tile_pixels) // _GRANULE)
    tile_granules = min(tile_granules, _MAX_TILE_GRANULES)          # VMEM cap (v7x)
    if p_granules >= 2:
        # guarantee at least two tiles so v7x's second TensorCore gets work
        tile_granules = min(tile_granules, -(-p_granules // 2))
    tile_granules = min(tile_granules, p_granules)
    n_tiles = -(-p_granules // tile_granules)
    tile_px = tile_granules * _GRANULE
    p_pad = n_tiles * tile_px
    r = tile_granules * _SUBLANE                                    # sublane rows / tile
    rows = n_tiles * r

    # ---- single fused producer pass: slice frame_z, stack, planarize, pad ----
    rays = ray_directions.reshape(p, 3).astype(out_dtype)
    fz = pixel_frames[..., 2].reshape(p, 3).astype(out_dtype)
    x6 = jnp.concatenate([rays, fz], axis=-1)                       # (p, 6)
    x6 = jnp.transpose(x6)                                          # (6, p) component-major
    x6 = jnp.pad(x6, ((0, 0), (0, p_pad - p)))
    x6 = x6.reshape(6, n_tiles, r, _LANE)
    x6 = jnp.transpose(x6, (1, 0, 2, 3))                            # (n_tiles, 6, r, 128) tile-major

    out2d = pl.pallas_call(
        _vignette_kernel,
        out_shape=jax.ShapeDtypeStruct((rows, _LANE), out_dtype),
        grid_spec=pltpu.PrefetchScalarGridSpec(
            num_scalar_prefetch=0,
            grid=(n_tiles,),
            in_specs=[
                # one contiguous (6*r*128) DMA segment per grid step
                pl.BlockSpec((None, 6, r, _LANE), lambda i: (i, 0, 0, 0)),
            ],
            out_specs=pl.BlockSpec((r, _LANE), lambda i: (i, 0)),
        ),
        compiler_params=pltpu.CompilerParams(
            dimension_semantics=("parallel",),
            # above v5e's 16 MiB scoped default, below every chip's physical VMEM
            vmem_limit_bytes=48 * 1024 * 1024,
        ),
    )(x6)

    out = out2d.reshape(p_pad)[:p].reshape(*batch_shape, 1)
    return out


def vignette_reference(ray_directions, pixel_frames):
    """Pure-JAX reference (same math as the PyTorch module)."""
    d = jnp.sum(ray_directions * pixel_frames[..., 2], axis=-1, keepdims=True)
    return d ** 3


if __name__ == "__main__":
    key = jax.random.PRNGKey(0)
    k_r, k_f = jax.random.split(key)

    B, H, W = 2, 16, 16

    ray_directions = jax.random.normal(k_r, (B, H, W, 3), jnp.float32)
    ray_directions = ray_directions / jnp.linalg.norm(
        ray_directions, axis=-1, keepdims=True)

    pixel_frames = jax.random.normal(k_f, (B, H, W, 3, 3), jnp.float32)

    out = vignette_shader(ray_directions, pixel_frames)
    out = jax.block_until_ready(out)

    ref = vignette_reference(ray_directions, pixel_frames)

    assert out.shape == (B, H, W, 1), out.shape
    assert out.dtype == ref.dtype, (out.dtype, ref.dtype)
    assert bool(jnp.all(jnp.isfinite(out)))
    max_err = float(jnp.max(jnp.abs(out - ref)))
    assert max_err < 1e-4, f"max abs err {max_err}"

    print("KERNEL_OK")
</pallas_src>

<mosaic_0001>
module attributes {stable_mosaic.version = 11 : i64} {
  func.func @_vignette_kernel(%arg0: i32, %arg1: memref<1x6x8x128xf32, #tpu.memory_space<vmem>>, %arg2: memref<8x128xf32, #tpu.memory_space<vmem>>) attributes {dimension_semantics = [#tpu.dimension_semantics<parallel>], iteration_bounds = array<i64: 1>, scalar_prefetch = 0 : i64, scratch_operands = 0 : i64, tpu.core_type = #tpu.core_type<tc>, window_params = [{transform_indices = @transform_0, window_bounds = array<i64: 1, 6, 8, 128>}, {transform_indices = @transform_1, window_bounds = array<i64: 8, 128>}]} {
    %c0 = arith.constant 0 : index
    %c0_0 = arith.constant 0 : index
    %c0_1 = arith.constant 0 : index
    %c0_2 = arith.constant 0 : index
    %0 = vector.load %arg1[%c0, %c0_0, %c0_1, %c0_2] : memref<1x6x8x128xf32, #tpu.memory_space<vmem>>, vector<1x1x8x128xf32>
    %1 = vector.shape_cast %0 : vector<1x1x8x128xf32> to vector<8x128xf32>
    %c0_3 = arith.constant 0 : index
    %c1 = arith.constant 1 : index
    %c0_4 = arith.constant 0 : index
    %c0_5 = arith.constant 0 : index
    %2 = vector.load %arg1[%c0_3, %c1, %c0_4, %c0_5] : memref<1x6x8x128xf32, #tpu.memory_space<vmem>>, vector<1x1x8x128xf32>
    %3 = vector.shape_cast %2 : vector<1x1x8x128xf32> to vector<8x128xf32>
    %c0_6 = arith.constant 0 : index
    %c2 = arith.constant 2 : index
    %c0_7 = arith.constant 0 : index
    %c0_8 = arith.constant 0 : index
    %4 = vector.load %arg1[%c0_6, %c2, %c0_7, %c0_8] : memref<1x6x8x128xf32, #tpu.memory_space<vmem>>, vector<1x1x8x128xf32>
    %5 = vector.shape_cast %4 : vector<1x1x8x128xf32> to vector<8x128xf32>
    %c0_9 = arith.constant 0 : index
    %c3 = arith.constant 3 : index
    %c0_10 = arith.constant 0 : index
    %c0_11 = arith.constant 0 : index
    %6 = vector.load %arg1[%c0_9, %c3, %c0_10, %c0_11] : memref<1x6x8x128xf32, #tpu.memory_space<vmem>>, vector<1x1x8x128xf32>
    %7 = vector.shape_cast %6 : vector<1x1x8x128xf32> to vector<8x128xf32>
    %c0_12 = arith.constant 0 : index
    %c4 = arith.constant 4 : index
    %c0_13 = arith.constant 0 : index
    %c0_14 = arith.constant 0 : index
    %8 = vector.load %arg1[%c0_12, %c4, %c0_13, %c0_14] : memref<1x6x8x128xf32, #tpu.memory_space<vmem>>, vector<1x1x8x128xf32>
    %9 = vector.shape_cast %8 : vector<1x1x8x128xf32> to vector<8x128xf32>
    %c0_15 = arith.constant 0 : index
    %c5 = arith.constant 5 : index
    %c0_16 = arith.constant 0 : index
    %c0_17 = arith.constant 0 : index
    %10 = vector.load %arg1[%c0_15, %c5, %c0_16, %c0_17] : memref<1x6x8x128xf32, #tpu.memory_space<vmem>>, vector<1x1x8x128xf32>
    %11 = vector.shape_cast %10 : vector<1x1x8x128xf32> to vector<8x128xf32>
    %12 = arith.mulf %1, %7 : vector<8x128xf32>
    %13 = arith.mulf %3, %9 : vector<8x128xf32>
    %14 = arith.addf %12, %13 : vector<8x128xf32>
    %15 = arith.mulf %5, %11 : vector<8x128xf32>
    %16 = arith.addf %14, %15 : vector<8x128xf32>
    %17 = arith.mulf %16, %16 : vector<8x128xf32>
    %18 = arith.mulf %17, %16 : vector<8x128xf32>
    %c0_18 = arith.constant 0 : index
    %c0_19 = arith.constant 0 : index
    %19 = vector.load %arg2[%c0_18, %c0_19] : memref<8x128xf32, #tpu.memory_space<vmem>>, vector<8x128xf32>
    tpu.vector_store %arg2[%c0_18, %c0_19], %18 {strides = array<i32>} : memref<8x128xf32, #tpu.memory_space<vmem>>, vector<8x128xf32>,
    return
  }
  func.func @transform_0(%arg0: i32) -> (i32, i32, i32, i32) {
    %c0_i32 = arith.constant 0 : i32
    %c0_i32_0 = arith.constant 0 : i32
    %c0_i32_1 = arith.constant 0 : i32
    %c0_i32_2 = arith.constant 0 : i32
    return %arg0, %c0_i32, %c0_i32_0, %c0_i32_1 : i32, i32, i32, i32
  }
  func.func @transform_1(%arg0: i32) -> (i32, i32) {
    %c0_i32 = arith.constant 0 : i32
    %c0_i32_0 = arith.constant 0 : i32
    return %arg0, %c0_i32 : i32, i32
  }
}

</mosaic_0001>

<llo_original>
// kernel: tpu_custom_call.1
$region0: #{tpu_custom_call.1}
  #allocation0 [shape = 'u32[]', space=smem, size = 0x4, offset = 0x4, fixed_abs, tag = 'smem constant byte address 0x4 - core index']
  #allocation1 [shape = 'u32[72,128]{1,0:T(1,128)}', space=vmem, size = 0x9000, scoped, tag = 'internal scratch']
  %s0 = inlined_call_operand.hbm [shape: f32[1,6,8,128], index: 0, kind: input, shape index: {}]
  %s1 = inlined_call_operand.hbm [shape: f32[8,128], index: 1, kind: output, shape index: {}]
  %s2 = sld [smem:[#allocation0]]
  $region18: #{tpu_custom_call.1} parent=0
    _
  %s4 = ssub.s32 1, %s2
  %s5 = scalar_select 0, %s4, %s2
  $region1: #{tpu_custom_call.1} parent=0
    #allocation2 [shape = 'u8[24576]{0}', space=vmem, size = 0x6000, scoped, tag = 'input window, operand 0, single buffered']
    #allocation3 [shape = 's32[1]{0}', space=sflag, size = 0x4, scoped, tag = 'scoped memory for tpu_custom_call.1']
    #allocation4 [shape = 's32[1]{0}', space=sflag, size = 0x4, scoped, tag = 'scoped memory for tpu_custom_call.1']
    #allocation5 [shape = 'u8[4096]{0}', space=vmem, size = 0x1000, scoped, tag = 'output window, operand 0, single buffered']
    %6 = vsyncpa [#allocation3], 0
    %7 = vsyncpa [#allocation4], 0
    // Predicated region
    $region2: #{tpu_custom_call.1} parent=1 // pred_check
      _
    $region3: #{tpu_custom_call.1} parent=1 // pred_check_branch
      %9 = sbr.rel (0) target = $region5
    $region4: #{tpu_custom_call.1} parent=1 // pred_region
      %11 = vsyncadd [#allocation3], 0
      %s12 = sshll.u32 %s0, 4
      %s13 = int_to_ptr.hbm [resolvable:$true] %s12
      %s14 = sshll.u32 [#allocation2], 4
      %s15 = int_to_ptr.vmem [resolvable:$true] %s14
      %20 = dma.hbm_to_vmem [thread:$0]  %s13, 768, %s15, [#allocation3], 128, 128, 8
    $region5: #{tpu_custom_call.1} parent=1 // pred_fallthru
      _
    // Predicated region
    $region6: #{tpu_custom_call.1} parent=1 // pred_check
      _
    $region7: #{tpu_custom_call.1} parent=1 // pred_check_branch
      %22 = sbr.rel (0) target = $region9
    $region8: #{tpu_custom_call.1} parent=1 // pred_region
      %24 = dma.done [#allocation3], 768
    $region9: #{tpu_custom_call.1} parent=1 // pred_fallthru
      _
    %v25 = vld [vmem:[#allocation2] sm:$0xff]
    %s26 = scalar_lea.vmem [#allocation2], 8
    %v27 = vld [vmem:[%s26] sm:$0xff]
    %s28 = scalar_lea.vmem [#allocation2], 16
    %v29 = vld [vmem:[%s28] sm:$0xff]
    %s30 = scalar_lea.vmem [#allocation2], 24
    %v31 = vld [vmem:[%s30] sm:$0xff]
    %s32 = scalar_lea.vmem [#allocation2], 32
    %v33 = vld [vmem:[%s32] sm:$0xff]
    %s34 = scalar_lea.vmem [#allocation2], 40
    %v35 = vld [vmem:[%s34] sm:$0xff]
    %v36 = vmul.f32 %v25, %v31
    %v37 = vmul.f32 %v27, %v33
    %v38 = vadd.f32 %v36, %v37
    %v39 = vmul.f32 %v29, %v35
    %v40 = vadd.f32 %v38, %v39
    %v41 = vmul.f32 %v40, %v40
    %v42 = vmul.f32 %v41, %v40
    %43 = vst [vmem:[#allocation5] sm:$0xff] %v42
    // Predicated region
    $region10: #{tpu_custom_call.1} parent=1 // pred_check
      _
    $region11: #{tpu_custom_call.1} parent=1 // pred_check_branch
      %45 = sbr.rel (0) target = $region13
    $region12: #{tpu_custom_call.1} parent=1 // pred_region
      %47 = vsyncadd [#allocation4], 0
      %s49 = sshll.u32 [#allocation5], 4
      %s50 = int_to_ptr.vmem [resolvable:$true] %s49
      %s51 = sshll.u32 %s1, 4
      %s52 = int_to_ptr.hbm [resolvable:$true] %s51
      %54 = dma.vmem_to_hbm [thread:$0]  %s50, 128, %s52, [#allocation4]
    $region13: #{tpu_custom_call.1} parent=1 // pred_fallthru
      _
    // Predicated region
    $region14: #{tpu_custom_call.1} parent=1 // pred_check
      _
    $region15: #{tpu_custom_call.1} parent=1 // pred_check_branch
      %56 = sbr.rel (0) target = $region17
    $region16: #{tpu_custom_call.1} parent=1 // pred_region
      %58 = dma.done [#allocation4], 128
    $region17: #{tpu_custom_call.1} parent=1 // pred_fallthru
      _
    %59 = vsyncpa [#allocation3], 1
    %60 = vsyncpa [#allocation4], 1

</llo_original>
